<compile_context>
chip_gen: v7x
topology: tpu7x:2x2x1
jax: 0.10.0
libtpu: 0.0.40
codegen_flags: <defaults>
</compile_context>

<pallas_src>
import functools

import jax
import jax.numpy as jnp
from jax.experimental import pallas as pl
from jax.experimental.pallas import tpu as pltpu


def _pos_enc_kernel(x_ref, pe_ref, o_ref):
    # x_ref:  (TB, TN) tile of the flattened input
    # pe_ref: (1, TN)  tile of the flattened positional table (broadcast over rows)
    # o_ref:  (TB, TN) output tile
    o_ref[...] = (x_ref[...] + pe_ref[...]).astype(o_ref.dtype)


def _largest_dividing_tile(n: int, unit: int, cap: int) -> int:
    """Largest multiple of `unit` that divides n and is <= cap.

    Falls back to the full dimension (always a legal block size) when n is not
    a multiple of `unit`.
    """
    if n % unit != 0:
        return n
    t = min(n, max(unit, (cap // unit) * unit))
    while n % t != 0:
        t -= unit
    return t


@jax.jit
def positional_encoding_forward(x: jax.Array, pe: jax.Array) -> jax.Array:
    """x: (B, S, D); pe: (1, num_pos, D). Returns x + pe[:, :S, :]."""
    B, S, D = x.shape
    N = S * D

    # Glue (tiny, done once): slice the positional table to the current
    # sequence length, flatten, and match the activation dtype so the kernel
    # does no per-element promote/downcast and pe read bandwidth is halved
    # for bf16 activations.
    pe_flat = (
        jax.lax.slice(pe, (0, 0, 0), (1, S, D)).reshape(1, N).astype(x.dtype)
    )
    # Free reshape (contiguous): lane-dense 2-D view of the activations.
    x2d = x.reshape(B, N)

    # Tile sizes: lane axis in big multiples of 128, row axis in multiples of 8
    # (or the full dim when it is small / not divisible). ~128 x 8192 f32
    # blocks are ~4 MiB each; with double-buffered x, pe and out the live VMEM
    # footprint stays well under v7x's 64 MiB physical VMEM.
    tn = _largest_dividing_tile(N, unit=128, cap=8192)
    tb = _largest_dividing_tile(B, unit=8, cap=128)

    # Column axis outermost, batch axis innermost: pe's block index only
    # depends on the outer axis, so each pe tile is DMA'd once per column tile
    # instead of once per batch tile.
    grid = (N // tn, B // tb)

    out2d = pl.pallas_call(
        _pos_enc_kernel,
        out_shape=jax.ShapeDtypeStruct((B, N), x.dtype),
        grid_spec=pl.GridSpec(
            grid=grid,
            in_specs=[
                pl.BlockSpec((tb, tn), lambda j, i: (i, j)),   # x tile
                pl.BlockSpec((1, tn), lambda j, i: (0, j)),    # pe tile (broadcast)
            ],
            out_specs=pl.BlockSpec((tb, tn), lambda j, i: (i, j)),
        ),
        compiler_params=pltpu.CompilerParams(
            # Both axes independent -> megacore sharding on v7x (2 TCs);
            # harmless on v5e/v6e (1 TC).
            dimension_semantics=("parallel", "parallel"),
            # Raise above the 16/32 MiB scoped defaults so the larger tiles
            # fit; stays below v7x's 64 MiB physical VMEM.
            vmem_limit_bytes=48 * 1024 * 1024,
        ),
    )(x2d, pe_flat)

    return out2d.reshape(B, S, D)


def init_positional_encoding(size: int, num_pos: int, init: str = "zeros",
                             key: jax.Array | None = None,
                             dtype=jnp.float32) -> jax.Array:
    """Deterministic replica of PositionalEncoding.__init__ parameter setup."""
    if init == "zeros":
        return jnp.zeros((1, num_pos, size), dtype=dtype)
    assert key is not None
    return (jax.random.normal(key, (1, num_pos, size), dtype=jnp.float32)
            * 0.02).astype(dtype)


if __name__ == "__main__":
    key = jax.random.PRNGKey(0)
    k_x, k_pe = jax.random.split(key)

    B, S, D = 2, 8, 32          # batch, sequence, hidden
    NUM_POS = 16                # num_pos >= S

    # Use the 'norm0.02' init so the add is nontrivial.
    pe = init_positional_encoding(size=D, num_pos=NUM_POS, init="norm0.02",
                                  key=k_pe)
    x = jax.random.normal(k_x, (B, S, D), dtype=jnp.float32)

    out = positional_encoding_forward(x, pe)
    out = jax.block_until_ready(out)

    # Reference check (plain JAX, mirrors PyTorch forward exactly).
    ref = x + pe[:, :S, :]
    assert out.shape == (B, S, D)
    assert jnp.allclose(out, ref, atol=1e-6, rtol=1e-6), "mismatch vs reference"

    print("KERNEL_OK")
</pallas_src>

<mosaic_0001>
module attributes {stable_mosaic.version = 11 : i64} {
  func.func @_pos_enc_kernel(%arg0: i32, %arg1: i32, %arg2: memref<2x256xf32, #tpu.memory_space<vmem>>, %arg3: memref<1x256xf32, #tpu.memory_space<vmem>>, %arg4: memref<2x256xf32, #tpu.memory_space<vmem>>) attributes {dimension_semantics = [#tpu.dimension_semantics<parallel>, #tpu.dimension_semantics<parallel>], iteration_bounds = array<i64: 1, 1>, scalar_prefetch = 0 : i64, scratch_operands = 0 : i64, tpu.core_type = #tpu.core_type<tc>, window_params = [{transform_indices = @transform_0, window_bounds = array<i64: 2, 256>}, {transform_indices = @transform_1, window_bounds = array<i64: 1, 256>}, {transform_indices = @transform_2, window_bounds = array<i64: 2, 256>}]} {
    %c0 = arith.constant 0 : index
    %c0_0 = arith.constant 0 : index
    %0 = vector.load %arg2[%c0, %c0_0] : memref<2x256xf32, #tpu.memory_space<vmem>>, vector<2x256xf32>
    %c0_1 = arith.constant 0 : index
    %c0_2 = arith.constant 0 : index
    %1 = vector.load %arg3[%c0_1, %c0_2] : memref<1x256xf32, #tpu.memory_space<vmem>>, vector<1x256xf32>
    %2 = vector.broadcast %1 : vector<1x256xf32> to vector<2x256xf32>
    %3 = arith.addf %0, %2 : vector<2x256xf32>
    %c0_3 = arith.constant 0 : index
    %c0_4 = arith.constant 0 : index
    %4 = vector.load %arg4[%c0_3, %c0_4] : memref<2x256xf32, #tpu.memory_space<vmem>>, vector<2x256xf32>
    tpu.vector_store %arg4[%c0_3, %c0_4], %3 {strides = array<i32>} : memref<2x256xf32, #tpu.memory_space<vmem>>, vector<2x256xf32>,
    return
  }
  func.func @transform_0(%arg0: i32, %arg1: i32) -> (i32, i32) {
    %c0_i32 = arith.constant 0 : i32
    return %arg1, %arg0 : i32, i32
  }
  func.func @transform_1(%arg0: i32, %arg1: i32) -> (i32, i32) {
    %c0_i32 = arith.constant 0 : i32
    %c0_i32_0 = arith.constant 0 : i32
    return %c0_i32, %arg0 : i32, i32
  }
  func.func @transform_2(%arg0: i32, %arg1: i32) -> (i32, i32) {
    %c0_i32 = arith.constant 0 : i32
    return %arg1, %arg0 : i32, i32
  }
}

</mosaic_0001>

<llo_original>
// kernel: positional_encoding_forward.1
$region0: #{positional_encoding_forward.1}
  #allocation0 [shape = 'u32[]', space=smem, size = 0x4, offset = 0x4, fixed_abs, tag = 'smem constant byte address 0x4 - core index']
  #allocation1 [shape = 'u32[144,128]{1,0:T(1,128)}', space=vmem, size = 0x12000, scoped, tag = 'internal scratch']
  %s0 = inlined_call_operand.vmem [shape: f32[2,256], index: 0, kind: input, shape index: {}]
  %s1 = inlined_call_operand.vmem [shape: f32[1,256], index: 1, kind: input, shape index: {}]
  %s2 = inlined_call_operand.vmem [shape: f32[2,256], index: 2, kind: output, shape index: {}]
  %s3 = sld [smem:[#allocation0]]
  $region18: #{positional_encoding_forward.1} parent=0
    _
  %s5 = ssub.s32 1, %s3
  %s6 = scalar_select 0, %s5, %s3
  // Predicated region
  $region2: #{positional_encoding_forward.1} parent=0 // pred_check
    _
  $region3: #{positional_encoding_forward.1} parent=0 // pred_check_branch
    %8 = sbr.rel (0) target = $region5
  $region4: #{positional_encoding_forward.1} parent=0 // pred_region
    _
  $region5: #{positional_encoding_forward.1} parent=0 // pred_fallthru
    _
  // Predicated region
  $region6: #{positional_encoding_forward.1} parent=0 // pred_check
    _
  $region7: #{positional_encoding_forward.1} parent=0 // pred_check_branch
    %10 = sbr.rel (0) target = $region9
  $region8: #{positional_encoding_forward.1} parent=0 // pred_region
    _
  $region9: #{positional_encoding_forward.1} parent=0 // pred_fallthru
    _
  %v11 = vld [vmem:[%s0] sm:$0xf]
  %v12 = vld [vmem:[%s1] sm:$0x3]
  %v14 = vlaneseq
  %v15 = vshrl.u32 %v14, 7
  %v16 = vsub.s32 0, %v15
  %v17 = vrot.slane %v12, %v16
  %v18 = vlaneseq
  %v19 = vshrl.u32 %v18, 7
  %v20 = vsub.s32 1, %v19
  %v21 = vrot.slane %v12, %v20
  %v22 = vcombine.low %v17, %v21
  %v24 = vunpack.c.l.s4 1983009808
  %v25 = vunpack.c.0.s8 %v24
  %v26 = vlaneseq
  %v27 = vshrl.u32 %v26, 7
  %v28 = vsub.s32 %v25, %v27
  %v29 = vrot.slane %v22, %v28
  %v31 = vadd.f32 %v11, %v29
  %32 = vst [vmem:[%s2] sm:$0xf] %v31
  // Predicated region
  $region10: #{positional_encoding_forward.1} parent=0 // pred_check
    _
  $region11: #{positional_encoding_forward.1} parent=0 // pred_check_branch
    %34 = sbr.rel (0) target = $region13
  $region12: #{positional_encoding_forward.1} parent=0 // pred_region
    _
  $region13: #{positional_encoding_forward.1} parent=0 // pred_fallthru
    _
  // Predicated region
  $region14: #{positional_encoding_forward.1} parent=0 // pred_check
    _
  $region15: #{positional_encoding_forward.1} parent=0 // pred_check_branch
    %36 = sbr.rel (0) target = $region17
  $region16: #{positional_encoding_forward.1} parent=0 // pred_region
    _
  $region17: #{positional_encoding_forward.1} parent=0 // pred_fallthru
    _

</llo_original>
